<compile_context>
chip_gen: v7x
topology: tpu7x:2x2x1
jax: 0.10.0
libtpu: 0.0.40
codegen_flags: <defaults>
</compile_context>

<pallas_src>
import jax
import jax.numpy as jnp
from jax.experimental import pallas as pl
from jax.experimental.pallas import tpu as pltpu


# ----------------------------------------------------------------------------
# Kernel: y = x * s + t   (s, t broadcast along one axis via their block shape)
# ----------------------------------------------------------------------------
def _affine_kernel(x_ref, s_ref, t_ref, o_ref):
    x = x_ref[...].astype(jnp.float32)
    o_ref[...] = (x * s_ref[...] + t_ref[...]).astype(o_ref.dtype)


# ----------------------------------------------------------------------------
# Tiling helpers
# ----------------------------------------------------------------------------
_BLOCK_BYTES = 2 * 1024 * 1024  # ~2 MiB x-block: 2 in-bufs + 2 out-bufs = 8 MiB


def _round_up(n, m):
    return ((n + m - 1) // m) * m


def _sublane_min(dtype):
    # dtype-aware minimum sublane tile: f32 -> 8, bf16/f16 -> 16, int8/fp8 -> 32
    itemsize = jnp.dtype(dtype).itemsize
    if itemsize >= 4:
        return 8
    if itemsize == 2:
        return 16
    return 32


def _choose_tiles(rows, cols, dtype):
    itemsize = jnp.dtype(dtype).itemsize
    sub_min = _sublane_min(dtype)
    # Lane tile: multiple of 128, capped so one block stays ~2 MiB.
    lane_tile = min(_round_up(cols, 128), 2048)
    # Sublane tile: multiple of the dtype minimum, filling the byte budget.
    max_sub = max(sub_min, (_BLOCK_BYTES // (lane_tile * itemsize)) // sub_min * sub_min)
    sub_tile = min(_round_up(rows, sub_min), max_sub)
    return sub_tile, lane_tile


def _affine_2d(x2, s, t, s_is_row):
    """y = x2 * s + t on a 2-D array.

    s_is_row=True : s/t are (1, cols)  (broadcast over rows).
    s_is_row=False: s/t are (rows, 1)  (broadcast over cols).
    """
    rows, cols = x2.shape
    sub_tile, lane_tile = _choose_tiles(rows, cols, x2.dtype)
    row_blocks = pl.cdiv(rows, sub_tile)
    col_blocks = pl.cdiv(cols, lane_tile)

    # Put the axis with the most blocks first (even megacore split on v7x).
    swap = col_blocks > row_blocks
    if swap:
        grid = (col_blocks, row_blocks)
        x_map = lambda c, r: (r, c)
        if s_is_row:
            p_shape, p_map = (1, lane_tile), (lambda c, r: (0, c))
        else:
            p_shape, p_map = (sub_tile, 1), (lambda c, r: (r, 0))
    else:
        grid = (row_blocks, col_blocks)
        x_map = lambda r, c: (r, c)
        if s_is_row:
            p_shape, p_map = (1, lane_tile), (lambda r, c: (0, c))
        else:
            p_shape, p_map = (sub_tile, 1), (lambda r, c: (r, 0))

    x_spec = pl.BlockSpec((sub_tile, lane_tile), x_map)
    p_spec = pl.BlockSpec(p_shape, p_map)

    # Advisory cost estimate (rsqrt folded out of the kernel -> 0 transcendentals).
    cost = pl.CostEstimate(
        flops=2 * rows * cols,
        transcendentals=0,
        bytes_accessed=2 * x2.size * x2.dtype.itemsize + 2 * s.size * 4,
    )

    return pl.pallas_call(
        _affine_kernel,
        out_shape=jax.ShapeDtypeStruct(x2.shape, x2.dtype),
        grid=grid,
        in_specs=[x_spec, p_spec, p_spec],
        out_specs=x_spec,
        compiler_params=pltpu.CompilerParams(
            dimension_semantics=("parallel", "parallel")),
        cost_estimate=cost,
    )(x2, s, t)


# ----------------------------------------------------------------------------
# Public wrapper: FrozenBatchNorm2d.forward
# ----------------------------------------------------------------------------
def frozen_batch_norm(x, weight, bias, running_mean, running_var):
    """x: (B, C, L); weight/bias/running_mean/running_var: (C,). No eps (as in spec)."""
    B, C, L = x.shape

    # Fold the frozen statistics once (O(C); NOT the "pre-scale the big tensor"
    # anti-pattern) so the kernel is a pure FMA with only 2 small params.
    scale = weight.astype(jnp.float32) * jax.lax.rsqrt(running_var.astype(jnp.float32))
    shift = bias.astype(jnp.float32) - running_mean.astype(jnp.float32) * scale

    if L >= 128:
        # Lane axis = L (already lane-dense); batch folded into the row axis.
        x2 = x.reshape(B * C, L)
        s2 = jnp.tile(scale, B).reshape(B * C, 1)
        t2 = jnp.tile(shift, B).reshape(B * C, 1)
        out2 = _affine_2d(x2, s2, t2, s_is_row=False)
    else:
        # Small L: pack C*L into the lane axis so the output last dim stays
        # lane-dense; params become per-position row vectors of length C*L.
        x2 = x.reshape(B, C * L)
        s2 = jnp.repeat(scale, L).reshape(1, C * L)
        t2 = jnp.repeat(shift, L).reshape(1, C * L)
        out2 = _affine_2d(x2, s2, t2, s_is_row=True)

    return out2.reshape(B, C, L)


# ----------------------------------------------------------------------------
# Self-test
# ----------------------------------------------------------------------------
def _reference(x, weight, bias, running_mean, running_var):
    scale = weight * jax.lax.rsqrt(running_var)
    shift = bias - running_mean * scale
    return x * scale.reshape(1, -1, 1) + shift.reshape(1, -1, 1)


if __name__ == "__main__":
    key = jax.random.PRNGKey(0)

    # Case 1: small shapes implied by the (1, C, 1) reshape in forward (L < 128 path).
    B, C, L = 2, 4, 16
    kx, kw, kb, km, kv, key = jax.random.split(key, 6)
    x = jax.random.normal(kx, (B, C, L), jnp.float32)
    weight = jax.random.normal(kw, (C,), jnp.float32)
    bias = jax.random.normal(kb, (C,), jnp.float32)
    running_mean = jax.random.normal(km, (C,), jnp.float32)
    running_var = jax.nn.softplus(jax.random.normal(kv, (C,), jnp.float32)) + 0.1

    out = frozen_batch_norm(x, weight, bias, running_mean, running_var)
    jax.block_until_ready(out)
    ref = _reference(x, weight, bias, running_mean, running_var)
    assert out.shape == x.shape and out.dtype == x.dtype
    assert jnp.allclose(out, ref, atol=1e-5, rtol=1e-5)

    # Case 2: non-divisible dims exercising the L >= 128 path with cdiv padding.
    B2, C2, L2 = 3, 5, 200
    kx2, kw2, kb2, km2, kv2, key = jax.random.split(key, 6)
    x2 = jax.random.normal(kx2, (B2, C2, L2), jnp.float32)
    w2 = jax.random.normal(kw2, (C2,), jnp.float32)
    b2 = jax.random.normal(kb2, (C2,), jnp.float32)
    m2 = jax.random.normal(km2, (C2,), jnp.float32)
    v2 = jax.nn.softplus(jax.random.normal(kv2, (C2,), jnp.float32)) + 0.1

    out2 = frozen_batch_norm(x2, w2, b2, m2, v2)
    jax.block_until_ready(out2)
    ref2 = _reference(x2, w2, b2, m2, v2)
    assert out2.shape == x2.shape and out2.dtype == x2.dtype
    assert jnp.allclose(out2, ref2, atol=1e-5, rtol=1e-5)

    print("KERNEL_OK")
</pallas_src>

<mosaic_0001>
module attributes {stable_mosaic.version = 11 : i64} {
  func.func @_affine_kernel(%arg0: i32, %arg1: i32, %arg2: memref<8x128xf32, #tpu.memory_space<vmem>>, %arg3: memref<1x128xf32, #tpu.memory_space<vmem>>, %arg4: memref<1x128xf32, #tpu.memory_space<vmem>>, %arg5: memref<8x128xf32, #tpu.memory_space<vmem>>) attributes {dimension_semantics = [#tpu.dimension_semantics<parallel>, #tpu.dimension_semantics<parallel>], iteration_bounds = array<i64: 1, 1>, scalar_prefetch = 0 : i64, scratch_operands = 0 : i64, tpu.core_type = #tpu.core_type<tc>, window_params = [{transform_indices = @transform_0, window_bounds = array<i64: 8, 128>}, {transform_indices = @transform_1, window_bounds = array<i64: 1, 128>}, {transform_indices = @transform_2, window_bounds = array<i64: 1, 128>}, {transform_indices = @transform_3, window_bounds = array<i64: 8, 128>}]} {
    %c0 = arith.constant 0 : index
    %c0_0 = arith.constant 0 : index
    %0 = vector.load %arg2[%c0, %c0_0] : memref<8x128xf32, #tpu.memory_space<vmem>>, vector<8x128xf32>
    %c0_1 = arith.constant 0 : index
    %c0_2 = arith.constant 0 : index
    %1 = vector.load %arg3[%c0_1, %c0_2] : memref<1x128xf32, #tpu.memory_space<vmem>>, vector<1x128xf32>
    %2 = vector.broadcast %1 : vector<1x128xf32> to vector<8x128xf32>
    %3 = arith.mulf %0, %2 : vector<8x128xf32>
    %c0_3 = arith.constant 0 : index
    %c0_4 = arith.constant 0 : index
    %4 = vector.load %arg4[%c0_3, %c0_4] : memref<1x128xf32, #tpu.memory_space<vmem>>, vector<1x128xf32>
    %5 = vector.broadcast %4 : vector<1x128xf32> to vector<8x128xf32>
    %6 = arith.addf %3, %5 : vector<8x128xf32>
    %c0_5 = arith.constant 0 : index
    %c0_6 = arith.constant 0 : index
    %7 = vector.load %arg5[%c0_5, %c0_6] : memref<8x128xf32, #tpu.memory_space<vmem>>, vector<8x128xf32>
    tpu.vector_store %arg5[%c0_5, %c0_6], %6 {strides = array<i32>} : memref<8x128xf32, #tpu.memory_space<vmem>>, vector<8x128xf32>,
    return
  }
  func.func @transform_0(%arg0: i32, %arg1: i32) -> (i32, i32) {
    %c0_i32 = arith.constant 0 : i32
    return %arg0, %arg1 : i32, i32
  }
  func.func @transform_1(%arg0: i32, %arg1: i32) -> (i32, i32) {
    %c0_i32 = arith.constant 0 : i32
    %c0_i32_0 = arith.constant 0 : i32
    return %c0_i32, %arg1 : i32, i32
  }
  func.func @transform_2(%arg0: i32, %arg1: i32) -> (i32, i32) {
    %c0_i32 = arith.constant 0 : i32
    %c0_i32_0 = arith.constant 0 : i32
    return %c0_i32, %arg1 : i32, i32
  }
  func.func @transform_3(%arg0: i32, %arg1: i32) -> (i32, i32) {
    %c0_i32 = arith.constant 0 : i32
    return %arg0, %arg1 : i32, i32
  }
}

</mosaic_0001>

<llo_original>
// kernel: tpu_custom_call.1
$region0: #{tpu_custom_call.1}
  #allocation0 [shape = 'u32[]', space=smem, size = 0x4, offset = 0x4, fixed_abs, tag = 'smem constant byte address 0x4 - core index']
  #allocation1 [shape = 'u32[144,128]{1,0:T(1,128)}', space=vmem, size = 0x12000, scoped, tag = 'internal scratch']
  %s0 = inlined_call_operand.hbm [shape: f32[2,64], index: 0, kind: input, shape index: {}]
  %s1 = inlined_call_operand.vmem [shape: f32[1,64], index: 1, kind: input, shape index: {}]
  %s2 = inlined_call_operand.vmem [shape: f32[1,64], index: 2, kind: input, shape index: {}]
  %s3 = inlined_call_operand.hbm [shape: f32[2,64], index: 3, kind: output, shape index: {}]
  %s4 = sld [smem:[#allocation0]]
  $region26: #{tpu_custom_call.1} parent=0
    _
  %s6 = ssub.s32 1, %s4
  %s7 = scalar_select 0, %s6, %s4
  $region1: #{tpu_custom_call.1} parent=0
    #allocation2 [shape = 'u8[4096]{0}', space=vmem, size = 0x1000, scoped, tag = 'input window, operand 0, single buffered']
    #allocation3 [shape = 's32[1]{0}', space=sflag, size = 0x4, scoped, tag = 'scoped memory for tpu_custom_call.1']
    #allocation4 [shape = 's32[1]{0}', space=sflag, size = 0x4, scoped, tag = 'scoped memory for tpu_custom_call.1']
    #allocation5 [shape = 'u8[4096]{0}', space=vmem, size = 0x1000, scoped, tag = 'output window, operand 0, single buffered']
    %8 = vsyncpa [#allocation3], 0
    %9 = vsyncpa [#allocation4], 0
    // Predicated region
    $region2: #{tpu_custom_call.1} parent=1 // pred_check
      _
    $region3: #{tpu_custom_call.1} parent=1 // pred_check_branch
      %11 = sbr.rel (0) target = $region5
    $region4: #{tpu_custom_call.1} parent=1 // pred_region
      %s13 = ssub.s32 128, 32
      %14 = vsyncadd [#allocation3], %s13
      %s15 = sshll.u32 [#allocation2], 4
      %s16 = int_to_ptr.vmem [resolvable:$true] %s15
      %21 = dma.hbm_to_vmem [thread:$0]  %s0, 32, %s16, [#allocation3], 32, 32, 2
    $region5: #{tpu_custom_call.1} parent=1 // pred_fallthru
      _
    // Predicated region
    $region6: #{tpu_custom_call.1} parent=1 // pred_check
      _
    $region7: #{tpu_custom_call.1} parent=1 // pred_check_branch
      %23 = sbr.rel (0) target = $region9
    $region8: #{tpu_custom_call.1} parent=1 // pred_region
      _
    $region9: #{tpu_custom_call.1} parent=1 // pred_fallthru
      _
    // Predicated region
    $region10: #{tpu_custom_call.1} parent=1 // pred_check
      _
    $region11: #{tpu_custom_call.1} parent=1 // pred_check_branch
      %25 = sbr.rel (0) target = $region13
    $region12: #{tpu_custom_call.1} parent=1 // pred_region
      _
    $region13: #{tpu_custom_call.1} parent=1 // pred_fallthru
      _
    // Predicated region
    $region14: #{tpu_custom_call.1} parent=1 // pred_check
      _
    $region15: #{tpu_custom_call.1} parent=1 // pred_check_branch
      %27 = sbr.rel (0) target = $region17
    $region16: #{tpu_custom_call.1} parent=1 // pred_region
      %28 = dma.done [#allocation3], 128
    $region17: #{tpu_custom_call.1} parent=1 // pred_fallthru
      _
    %v29 = vld [vmem:[#allocation2] sm:$0xff]
    %v30 = vld [vmem:[%s1] sm:$0x1]
    %v32 = vlaneseq
    %v33 = vshrl.u32 %v32, 7
    %v34 = vsub.s32 0, %v33
    %v35 = vrot.slane %v30, %v34
    %v37 = vmul.f32 %v29, %v35
    %v38 = vld [vmem:[%s2] sm:$0x1]
    %v40 = vlaneseq
    %v41 = vshrl.u32 %v40, 7
    %v42 = vsub.s32 0, %v41
    %v43 = vrot.slane %v38, %v42
    %v45 = vadd.f32 %v37, %v43
    %46 = vst [vmem:[#allocation5] sm:$0xff] %v45
    // Predicated region
    $region18: #{tpu_custom_call.1} parent=1 // pred_check
      _
    $region19: #{tpu_custom_call.1} parent=1 // pred_check_branch
      %48 = sbr.rel (0) target = $region21
    $region20: #{tpu_custom_call.1} parent=1 // pred_region
      %s50 = ssub.s32 128, 32
      %51 = vsyncadd [#allocation4], %s50
      %s52 = sshll.u32 [#allocation5], 4
      %s53 = int_to_ptr.vmem [resolvable:$true] %s52
      %58 = dma.vmem_to_hbm [thread:$0]  %s53, 32, %s3, [#allocation4], 32, 32, 2
    $region21: #{tpu_custom_call.1} parent=1 // pred_fallthru
      _
    // Predicated region
    $region22: #{tpu_custom_call.1} parent=1 // pred_check
      _
    $region23: #{tpu_custom_call.1} parent=1 // pred_check_branch
      %60 = sbr.rel (0) target = $region25
    $region24: #{tpu_custom_call.1} parent=1 // pred_region
      %61 = dma.done [#allocation4], 128
    $region25: #{tpu_custom_call.1} parent=1 // pred_fallthru
      _
    %62 = vsyncpa [#allocation3], 1
    %63 = vsyncpa [#allocation4], 1

</llo_original>
